<compile_context>
chip_gen: v7x
topology: tpu7x:2x2x1
jax: 0.10.0
libtpu: 0.0.40
codegen_flags: <defaults>
</compile_context>

<pallas_src>
import math

import jax
import jax.numpy as jnp
from jax.experimental import pallas as pl
from jax.experimental.pallas import tpu as pltpu

_INV_SQRT2 = 1.0 / math.sqrt(2.0)


def _bert_intermediate_kernel(x_ref, w_ref, b_ref, o_ref):
    # x_ref: [tm, H]   (pipelined over the M grid axis)
    # w_ref: [H, I]    (VMEM-resident across the whole grid)
    # b_ref: [1, I]    (VMEM-resident)
    # o_ref: [tm, I]
    # Native-dtype operands into the MXU, f32 accumulation.
    y = jnp.dot(x_ref[...], w_ref[...], preferred_element_type=jnp.float32)
    y = y + b_ref[...].astype(jnp.float32)
    # Exact (erf-based) GELU, matching torch.nn.functional.gelu default,
    # computed in f32 on the accumulator (EUP/VPU epilogue, free under MXU-bound regime).
    y = 0.5 * y * (1.0 + jax.lax.erf(y * _INV_SQRT2))
    o_ref[...] = y.astype(o_ref.dtype)


def _round_up(x, m):
    return ((x + m - 1) // m) * m


def bert_intermediate(hidden_states, weight_t, bias, *, tm=512, vmem_limit_bytes=None):
    """Fused Linear + exact-GELU (BertIntermediate forward).

    hidden_states: [B, S, H]
    weight_t:      [H, I]  -- transpose of PyTorch nn.Linear.weight ([I, H]).
                              Store it pre-transposed once; do NOT transpose per call.
    bias:          [I]
    tm:            row tile (multiple of 8; 256-512 is a good default; lower it
                   or raise vmem_limit_bytes on v5e/v7x if VMEM-limited).
    """
    B, S, H = hidden_states.shape
    H_w, I = weight_t.shape
    assert H_w == H, f"weight_t must be [H, I]; got {weight_t.shape} for H={H}"
    M = B * S

    x2d = hidden_states.reshape(M, H)

    # Row tile: multiple of 8 (sublane), capped by tm; pad M so the grid covers
    # it exactly. Padded rows are computed on zeros and sliced away afterwards.
    tm_eff = min(tm, _round_up(M, 8))
    M_pad = _round_up(M, tm_eff)
    if M_pad != M:
        x2d = jnp.pad(x2d, ((0, M_pad - M), (0, 0)))

    b2d = bias.reshape(1, I)
    grid = (M_pad // tm_eff,)

    out2d = pl.pallas_call(
        _bert_intermediate_kernel,
        out_shape=jax.ShapeDtypeStruct((M_pad, I), hidden_states.dtype),
        grid=grid,
        in_specs=[
            pl.BlockSpec((tm_eff, H), lambda i: (i, 0)),  # x: tiled over M, pipelined
            pl.BlockSpec((H, I), lambda i: (0, 0)),       # W: constant index -> resident
            pl.BlockSpec((1, I), lambda i: (0, 0)),       # bias: resident
        ],
        out_specs=pl.BlockSpec((tm_eff, I), lambda i: (i, 0)),
        compiler_params=pltpu.CompilerParams(
            dimension_semantics=("parallel",),   # shard M-tiles across cores (v7x 2 TCs)
            vmem_limit_bytes=vmem_limit_bytes,
        ),
    )(x2d, weight_t, b2d)

    return out2d[:M].reshape(B, S, I)


if __name__ == "__main__":
    hidden_size = 16
    intermediate_size = 64
    batch, seq = 2, 8

    key = jax.random.PRNGKey(0)
    k_x, k_w, k_b = jax.random.split(key, 3)

    # Deterministic parameter init mimicking nn.Linear's U(-1/sqrt(fan_in), +).
    bound = 1.0 / math.sqrt(hidden_size)
    weight = jax.random.uniform(
        k_w, (intermediate_size, hidden_size), jnp.float32, -bound, bound
    )  # PyTorch layout [I, H]
    bias = jax.random.uniform(
        k_b, (intermediate_size,), jnp.float32, -bound, bound
    )
    x = jax.random.normal(k_x, (batch, seq, hidden_size), jnp.float32)

    # One-time conversion to the kernel's weight layout [H, I]
    # (a real model would store the parameter pre-transposed).
    weight_t = jnp.asarray(weight).T

    out = bert_intermediate(x, weight_t, bias)
    jax.block_until_ready(out)

    # Reference check in plain JAX (exact-erf GELU).
    ref = x @ weight.T + bias
    ref = 0.5 * ref * (1.0 + jax.lax.erf(ref / jnp.sqrt(2.0)))
    assert out.shape == (batch, seq, intermediate_size)
    assert jnp.allclose(out, ref, atol=1e-5, rtol=1e-5)

    print("KERNEL_OK")
</pallas_src>

<mosaic_0001>
module attributes {stable_mosaic.version = 11 : i64} {
  func.func @_bert_intermediate_kernel(%arg0: i32, %arg1: memref<16x16xf32, #tpu.memory_space<vmem>>, %arg2: memref<16x64xf32, #tpu.memory_space<vmem>>, %arg3: memref<1x64xf32, #tpu.memory_space<vmem>>, %arg4: memref<16x64xf32, #tpu.memory_space<vmem>>) attributes {dimension_semantics = [#tpu.dimension_semantics<parallel>], iteration_bounds = array<i64: 1>, scalar_prefetch = 0 : i64, scratch_operands = 0 : i64, tpu.core_type = #tpu.core_type<tc>, window_params = [{transform_indices = @transform_0, window_bounds = array<i64: 16, 16>}, {pipeline_mode = #tpu.pipeline_mode<synchronous>, transform_indices = @transform_1, window_bounds = array<i64: 16, 64>}, {pipeline_mode = #tpu.pipeline_mode<synchronous>, transform_indices = @transform_2, window_bounds = array<i64: 1, 64>}, {transform_indices = @transform_3, window_bounds = array<i64: 16, 64>}]} {
    %c0 = arith.constant 0 : index
    %c0_0 = arith.constant 0 : index
    %0 = vector.load %arg1[%c0, %c0_0] : memref<16x16xf32, #tpu.memory_space<vmem>>, vector<16x16xf32>
    %c0_1 = arith.constant 0 : index
    %c0_2 = arith.constant 0 : index
    %1 = vector.load %arg2[%c0_1, %c0_2] : memref<16x64xf32, #tpu.memory_space<vmem>>, vector<16x64xf32>
    %cst = arith.constant dense<0.000000e+00> : vector<16x64xf32>
    %2 = tpu.matmul %0, %1, %cst {dimension_numbers = #tpu.dot_dimension_numbers<[1], [0], [0], [1], [0, 0, 1, 1], [], []>} : vector<16x16xf32>, vector<16x64xf32>, vector<16x64xf32> -> vector<16x64xf32>
    %c0_3 = arith.constant 0 : index
    %c0_4 = arith.constant 0 : index
    %3 = vector.load %arg3[%c0_3, %c0_4] : memref<1x64xf32, #tpu.memory_space<vmem>>, vector<1x64xf32>
    %4 = vector.broadcast %3 : vector<1x64xf32> to vector<16x64xf32>
    %5 = arith.addf %2, %4 : vector<16x64xf32>
    %cst_5 = arith.constant 5.000000e-01 : f32
    %6 = vector.broadcast %cst_5 : f32 to vector<16x64xf32>
    %7 = arith.mulf %6, %5 : vector<16x64xf32>
    %cst_6 = arith.constant 0.707106769 : f32
    %8 = vector.broadcast %cst_6 : f32 to vector<16x64xf32>
    %9 = arith.mulf %5, %8 : vector<16x64xf32>
    %10 = math.erf %9 : vector<16x64xf32>
    %cst_7 = arith.constant 1.000000e+00 : f32
    %11 = vector.broadcast %cst_7 : f32 to vector<16x64xf32>
    %12 = arith.addf %11, %10 : vector<16x64xf32>
    %13 = arith.mulf %7, %12 : vector<16x64xf32>
    %c0_8 = arith.constant 0 : index
    %c0_9 = arith.constant 0 : index
    %14 = vector.load %arg4[%c0_8, %c0_9] : memref<16x64xf32, #tpu.memory_space<vmem>>, vector<16x64xf32>
    tpu.vector_store %arg4[%c0_8, %c0_9], %13 {strides = array<i32>} : memref<16x64xf32, #tpu.memory_space<vmem>>, vector<16x64xf32>,
    return
  }
  func.func @transform_0(%arg0: i32) -> (i32, i32) {
    %c0_i32 = arith.constant 0 : i32
    %c0_i32_0 = arith.constant 0 : i32
    return %arg0, %c0_i32 : i32, i32
  }
  func.func @transform_1(%arg0: i32) -> (i32, i32) {
    %c0_i32 = arith.constant 0 : i32
    %c0_i32_0 = arith.constant 0 : i32
    %c0_i32_1 = arith.constant 0 : i32
    return %c0_i32, %c0_i32_0 : i32, i32
  }
  func.func @transform_2(%arg0: i32) -> (i32, i32) {
    %c0_i32 = arith.constant 0 : i32
    %c0_i32_0 = arith.constant 0 : i32
    %c0_i32_1 = arith.constant 0 : i32
    return %c0_i32, %c0_i32_0 : i32, i32
  }
  func.func @transform_3(%arg0: i32) -> (i32, i32) {
    %c0_i32 = arith.constant 0 : i32
    %c0_i32_0 = arith.constant 0 : i32
    return %arg0, %c0_i32 : i32, i32
  }
}

</mosaic_0001>

<llo_original>
// kernel: tpu_custom_call.1
$region0: #{tpu_custom_call.1}
  #allocation0 [shape = 'u32[]', space=smem, size = 0x4, offset = 0x4, fixed_abs, tag = 'smem constant byte address 0x4 - core index']
  #allocation1 [shape = 'u32[144,128]{1,0:T(1,128)}', space=vmem, size = 0x12000, scoped, tag = 'internal scratch']
  %s0 = inlined_call_operand.hbm [shape: f32[16,16], index: 0, kind: input, shape index: {}]
  %s1 = inlined_call_operand.hbm [shape: f32[16,64], index: 1, kind: input, shape index: {}]
  %s2 = inlined_call_operand.vmem [shape: f32[1,64], index: 2, kind: input, shape index: {}]
  %s3 = inlined_call_operand.hbm [shape: f32[16,64], index: 3, kind: output, shape index: {}]
  %s4 = sld [smem:[#allocation0]]
  $region30: #{tpu_custom_call.1} parent=0
    _
  %s6 = ssub.s32 1, %s4
  %s7 = scalar_select 0, %s6, %s4
  $region1: #{tpu_custom_call.1} parent=0
    #allocation2 [shape = 'u8[8192]{0}', space=vmem, size = 0x2000, scoped, tag = 'input window, operand 0, single buffered']
    #allocation3 [shape = 's32[1]{0}', space=sflag, size = 0x4, scoped, tag = 'scoped memory for tpu_custom_call.1']
    #allocation4 [shape = 's32[1]{0}', space=sflag, size = 0x4, scoped, tag = 'scoped memory for tpu_custom_call.1']
    #allocation5 [shape = 'u8[8192]{0}', space=vmem, size = 0x2000, scoped, tag = 'input window, operand 1, single buffered']
    #allocation6 [shape = 's32[1]{0}', space=sflag, size = 0x4, scoped, tag = 'scoped memory for tpu_custom_call.1']
    #allocation7 [shape = 'u8[8192]{0}', space=vmem, size = 0x2000, scoped, tag = 'output window, operand 0, single buffered']
    %8 = vsyncpa [#allocation3], 0
    %9 = vsyncpa [#allocation6], 0
    %10 = vsyncpa [#allocation4], 0
    // Predicated region
    $region2: #{tpu_custom_call.1} parent=1 // pred_check
      _
    $region3: #{tpu_custom_call.1} parent=1 // pred_check_branch
      %12 = sbr.rel (0) target = $region5
    $region4: #{tpu_custom_call.1} parent=1 // pred_region
      %s14 = ssub.s32 256, 256
      %15 = vsyncadd [#allocation3], %s14
      %s16 = sshll.u32 [#allocation2], 4
      %s17 = int_to_ptr.vmem [resolvable:$true] %s16
      %22 = dma.hbm_to_vmem [thread:$0]  %s0, 256, %s17, [#allocation3], 128, 128, 8
    $region5: #{tpu_custom_call.1} parent=1 // pred_fallthru
      _
    // Predicated region
    $region6: #{tpu_custom_call.1} parent=1 // pred_check
      _
    $region7: #{tpu_custom_call.1} parent=1 // pred_check_branch
      %24 = sbr.rel (0) target = $region9
    $region8: #{tpu_custom_call.1} parent=1 // pred_region
      %s26 = ssub.s32 256, 256
      %27 = vsyncadd [#allocation6], %s26
      %s28 = sshll.u32 [#allocation5], 4
      %s29 = int_to_ptr.vmem [resolvable:$true] %s28
      %34 = dma.hbm_to_vmem [thread:$0]  %s1, 256, %s29, [#allocation6], 128, 128, 8
    $region9: #{tpu_custom_call.1} parent=1 // pred_fallthru
      _
    // Predicated region
    $region10: #{tpu_custom_call.1} parent=1 // pred_check
      _
    $region11: #{tpu_custom_call.1} parent=1 // pred_check_branch
      %36 = sbr.rel (0) target = $region13
    $region12: #{tpu_custom_call.1} parent=1 // pred_region
      _
    $region13: #{tpu_custom_call.1} parent=1 // pred_fallthru
      _
    // Predicated region
    $region14: #{tpu_custom_call.1} parent=1 // pred_check
      _
    $region15: #{tpu_custom_call.1} parent=1 // pred_check_branch
      %38 = sbr.rel (0) target = $region17
    $region16: #{tpu_custom_call.1} parent=1 // pred_region
      %39 = dma.done [#allocation3], 256
    $region17: #{tpu_custom_call.1} parent=1 // pred_fallthru
      _
    // Predicated region
    $region18: #{tpu_custom_call.1} parent=1 // pred_check
      _
    $region19: #{tpu_custom_call.1} parent=1 // pred_check_branch
      %41 = sbr.rel (0) target = $region21
    $region20: #{tpu_custom_call.1} parent=1 // pred_region
      %42 = dma.done [#allocation6], 256
    $region21: #{tpu_custom_call.1} parent=1 // pred_fallthru
      _
    %v43 = vld [vmem:[#allocation2] sm:$0xff]
    %v44 = vld [vmem:[#allocation2 + $0x8] sm:$0xff]
    %v45 = vld [vmem:[#allocation5] sm:$0xff]
    %v46 = vld [vmem:[#allocation5 + $0x8] sm:$0xff]
    %v47 = vld [vmem:[%s2] sm:$0x1]
    %v49 = vlaneseq
    %v50 = vshrl.u32 %v49, 7
    %v51 = vsub.s32 0, %v50
    %v52 = vrot.slane %v47, %v51
    %vm54 = vcmask 130048
    %v56 = vsel %vm54, %v43, 0
    %v59 = vsel %vm54, %v44, 0
    %61 = vmatprep.subr.mxu0 0.0
    %62 = vmatpush1.msra.mxu0 %v45
    %63 = vmatprep.subr.mxu0 0.0
    %64 = vmatpush1.msra.mxu0 %v46
    %65 = vmatprep.subr.mxu0 0.0
    %66 = vmatpush1.msra.mxu0 0.0
    %67 = vmatprep.subr.mxu0 0.0
    %68 = vmatpush1.msra.mxu0 0.0
    %69 = vmatprep.subr.mxu0 0.0
    %70 = vmatpush1.msra.mxu0 0.0
    %71 = vmatprep.subr.mxu0 0.0
    %72 = vmatpush1.msra.mxu0 0.0
    %73 = vmatprep.subr.mxu0 0.0
    %74 = vmatpush1.msra.mxu0 0.0
    %75 = vmatprep.subr.mxu0 0.0
    %76 = vmatpush1.msra.mxu0 0.0
    %77 = vmatprep.subr.mxu0 0.0
    %78 = vmatpush1.msra.mxu0 0.0
    %79 = vmatprep.subr.mxu0 0.0
    %80 = vmatpush1.msra.mxu0 0.0
    %81 = vmatprep.subr.mxu0 0.0
    %82 = vmatpush1.msra.mxu0 0.0
    %83 = vmatprep.subr.mxu0 0.0
    %84 = vmatpush1.msra.mxu0 0.0
    %85 = vmatprep.subr.mxu0 0.0
    %86 = vmatpush1.msra.mxu0 0.0
    %87 = vmatprep.subr.mxu0 0.0
    %88 = vmatpush1.msra.mxu0 0.0
    %89 = vmatprep.subr.mxu0 0.0
    %90 = vmatpush1.msra.mxu0 0.0
    %91 = vmatprep.subr.mxu0 0.0
    %92 = vmatpush1.msra.mxu0 0.0
    %93 = vmatprep.subr.mxu0 0.0
    %94 = vmatpush1.msra.mxu0 0.0
    %95 = vmatprep.subr.mxu0 0.0
    %96 = vmatpush1.msra.mxu0 0.0
    %97 = vmatprep.subr.mxu0 0.0
    %98 = vmatpush1.msra.mxu0 0.0
    %99 = vmatprep.subr.mxu0 0.0
    %100 = vmatpush1.msra.mxu0 0.0
    %101 = vmatprep.subr.mxu0 0.0
    %102 = vmatpush1.msra.mxu0 0.0
    %103 = vmatprep.subr.mxu0 0.0
    %104 = vmatpush1.msra.mxu0 0.0
    %105 = vmatprep.subr.mxu0 0.0
    %106 = vmatpush1.msra.mxu0 0.0
    %107 = vmatprep.subr.mxu0 0.0
    %108 = vmatpush1.msra.mxu0 0.0
    %109 = vmatprep.subr.mxu0 0.0
    %110 = vmatpush1.msra.mxu0 0.0
    %111 = vmatprep.subr.mxu0 0.0
    %112 = vmatpush1.msra.mxu0 0.0
    %113 = vmatprep.subr.mxu0 0.0
    %114 = vmatpush1.msra.mxu0 0.0
    %115 = vmatprep.subr.mxu0 0.0
    %116 = vmatpush1.msra.mxu0 0.0
    %117 = vmatprep.subr.mxu0 0.0
    %118 = vmatpush1.msra.mxu0 0.0
    %119 = vmatprep.subr.mxu0 0.0
    %120 = vmatpush1.msra.mxu0 0.0
    %121 = vmatprep.subr.mxu0 0.0
    %122 = vmatpush1.msra.mxu0 0.0
    %123 = vmatprep.subr.mxu0 0.0
    %124 = vmatpush1.msra.mxu0 0.0
    %125 = vmatprep.mubr.f32.mxu0 0.0
    %126 = vmatmul.mubr.f32.gmra.mrb[0].mxu0 %v56
    %v127 = vpop.f32.mrb[0].mxu0
    %v128 = vadd.f32 %v52, %v127
    %v129 = vpop.f32.mrb[0].mxu0
    %130 = vmatprep.mubr.f32.mxu0 0.0
    %131 = vmatmul.mubr.f32.gmra.mrb[0].mxu0 %v59
    %v132 = vpop.f32.mrb[0].mxu0
    %v133 = vadd.f32 %v52, %v132
    %v134 = vpop.f32.mrb[0].mxu0
    %135 = vdwg.mxu0
    %v136 = vmul.f32 %v128, 0.5
    %v137 = vmul.f32 %v133, 0.5
    %v138 = vmul.f32 %v128, 0.70710677
    %v139 = vmul.f32 %v133, 0.70710677
    %v140 = verf.f32.pop %v138
    %v141 = verf.f32.pop %v139
    %v142 = vadd.f32 %v140, 1.0
    %v143 = vadd.f32 %v141, 1.0
    %v144 = vmul.f32 %v136, %v142
    %v145 = vmul.f32 %v137, %v143
    %vm146 = vcmask 523264
    %147 = vst.msk [vmem:[#allocation7] sm:$0xff] %vm146, %v144
    %148 = vst.msk [vmem:[#allocation7 + $0x8] sm:$0xff] %vm146, %v145
    // Predicated region
    $region22: #{tpu_custom_call.1} parent=1 // pred_check
      _
    $region23: #{tpu_custom_call.1} parent=1 // pred_check_branch
      %150 = sbr.rel (0) target = $region25
    $region24: #{tpu_custom_call.1} parent=1 // pred_region
      %s152 = ssub.s32 256, 256
      %153 = vsyncadd [#allocation4], %s152
      %s154 = sshll.u32 [#allocation7], 4
      %s155 = int_to_ptr.vmem [resolvable:$true] %s154
      %160 = dma.vmem_to_hbm [thread:$0]  %s155, 256, %s3, [#allocation4], 128, 128, 8
    $region25: #{tpu_custom_call.1} parent=1 // pred_fallthru
      _
    // Predicated region
    $region26: #{tpu_custom_call.1} parent=1 // pred_check
      _
    $region27: #{tpu_custom_call.1} parent=1 // pred_check_branch
      %162 = sbr.rel (0) target = $region29
    $region28: #{tpu_custom_call.1} parent=1 // pred_region
      %163 = dma.done [#allocation4], 256
    $region29: #{tpu_custom_call.1} parent=1 // pred_fallthru
      _
    %164 = vsyncpa [#allocation3], 1
    %165 = vsyncpa [#allocation6], 1
    %166 = vsyncpa [#allocation4], 1

</llo_original>
